<compile_context>
chip_gen: v7x
topology: tpu7x:2x2x1
jax: 0.10.0
libtpu: 0.0.40
codegen_flags: <defaults>
</compile_context>

<pallas_src>
import jax
import jax.numpy as jnp
from jax import lax
from jax.experimental import pallas as pl
from jax.experimental.pallas import tpu as pltpu


def fused_embedding_bag_kernel(idx_ref, off_ref, proj_ref, bias_ref, out_ref):
    # idx_ref  : SMEM int32[N]         (scalar prefetch)
    # off_ref  : SMEM int32[B_pad + 1] (scalar prefetch; padded bags have start == end == N)
    # proj_ref : SMEM f32[V]           fused table @ W^T
    # bias_ref : SMEM f32[1]
    # out_ref  : VMEM f32[1, TB]       one lane-dense tile of bags per grid step
    t = pl.program_id(0)
    TB = out_ref.shape[1]
    lane = lax.broadcasted_iota(jnp.int32, (1, TB), 1)  # hoisted once per tile

    def bag_body(b, logits):
        g = t * TB + b                      # global bag id
        start = off_ref[g]
        end = off_ref[g + 1]

        def idx_body(i, acc):
            # One scalar add per index: proj already folds the Linear(E->1).
            return acc + proj_ref[idx_ref[i]]

        # Empty bag (start == end) yields 0.0, matching PyTorch sum-mode semantics.
        s = lax.fori_loop(start, end, idx_body, jnp.float32(0.0))
        # Insert the scalar logit into lane b of the tile-wide logit row (VPU select).
        return jnp.where(lane == b, s, logits)

    logits = lax.fori_loop(0, TB, bag_body, jnp.zeros((1, TB), jnp.float32))

    # Vectorized epilogue: bias add + sigmoid over the whole tile, single lane-dense store.
    x = logits + bias_ref[0]
    out_ref[...] = (1.0 / (1.0 + jnp.exp(-x))).astype(out_ref.dtype)


def embedding_bag_model(indices, offsets, table, weight, bias, *, tile_b=128):
    N = indices.shape[0]
    B = offsets.shape[0]
    V, E = table.shape

    # Fuse Linear(E->1) into the embedding table (exact: sum-bag and linear commute).
    proj = (table.astype(jnp.float32) @ weight.reshape(E, 1).astype(jnp.float32)).reshape(V)

    # Clamp indices so a bad index cannot read out of bounds in SMEM.
    idx = jnp.clip(indices.astype(jnp.int32), 0, V - 1)

    num_tiles = pl.cdiv(B, tile_b)
    B_pad = num_tiles * tile_b
    # Pad offsets with N so padded bags are empty; off_full[B] = N also serves as the end of
    # the last real bag (include_last_offset=False semantics).  Offsets assumed non-decreasing.
    off_full = jnp.concatenate(
        [offsets.astype(jnp.int32), jnp.full((B_pad + 1 - B,), N, jnp.int32)]
    )

    grid_spec = pltpu.PrefetchScalarGridSpec(
        num_scalar_prefetch=2,  # indices, offsets -> SMEM
        grid=(num_tiles,),
        in_specs=[
            pl.BlockSpec(memory_space=pltpu.MemorySpace.SMEM),  # proj  f32[V]
            pl.BlockSpec(memory_space=pltpu.MemorySpace.SMEM),  # bias  f32[1]
        ],
        out_specs=pl.BlockSpec((1, tile_b), lambda t, *_: (0, t)),  # distinct tile per step
    )

    out_row = pl.pallas_call(
        fused_embedding_bag_kernel,
        out_shape=jax.ShapeDtypeStruct((1, B_pad), jnp.float32),
        grid_spec=grid_spec,
        compiler_params=pltpu.CompilerParams(dimension_semantics=("parallel",)),
    )(idx, off_full, proj, bias.reshape(1).astype(jnp.float32))

    return out_row[0, :B].reshape(B, 1)


def reference_forward(indices, offsets, table, weight, bias):
    """Pure-JAX reference matching nn.EmbeddingBag(mode='sum') -> Linear -> Sigmoid."""
    N = indices.shape[0]
    B = offsets.shape[0]
    E = table.shape[1]
    off_full = jnp.concatenate([offsets, jnp.array([N], jnp.int32)])
    bags = []
    for i in range(B):
        s = int(off_full[i])
        e = int(off_full[i + 1])
        if e > s:
            bags.append(jnp.sum(table[indices[s:e]], axis=0))
        else:
            bags.append(jnp.zeros((E,), jnp.float32))
    embeds = jnp.stack(bags)                                  # (B, E)
    logits = embeds @ weight.reshape(1, E).T + bias.reshape(1, 1)
    return jax.nn.sigmoid(logits)                             # (B, 1)


if __name__ == "__main__":
    vocab_size = 50
    embedding_size = 32
    num_bags = 4
    num_indices = 10

    key = jax.random.PRNGKey(0)
    k_tab, k_w, k_b, k_idx = jax.random.split(key, 4)

    # Deterministic synthetic parameters (shapes follow the module's __init__).
    table = jax.random.normal(k_tab, (vocab_size, embedding_size), jnp.float32)
    weight = jax.random.normal(k_w, (1, embedding_size), jnp.float32) * 0.1
    bias = jax.random.normal(k_b, (1,), jnp.float32) * 0.1

    # Flat indices + bag offsets (includes an empty bag, like EmbeddingBag supports).
    indices = jax.random.randint(k_idx, (num_indices,), 0, vocab_size, jnp.int32)
    offsets = jnp.array([0, 3, 3, 7], jnp.int32)   # bag 1 is empty

    out = embedding_bag_model(indices, offsets, table, weight, bias)
    out = jax.block_until_ready(out)

    ref = reference_forward(indices, offsets, table, weight, bias)
    assert out.shape == (num_bags, 1)
    assert jnp.allclose(out, ref, atol=1e-5, rtol=1e-5), (out, ref)

    print("KERNEL_OK")
</pallas_src>

<mosaic_0001>
module attributes {stable_mosaic.version = 11 : i64} {
  func.func @fused_embedding_bag_kernel(%arg0: i32, %arg1: memref<10xi32, #tpu.memory_space<smem>>, %arg2: memref<129xi32, #tpu.memory_space<smem>>, %arg3: memref<50xf32, #tpu.memory_space<smem>>, %arg4: memref<1xf32, #tpu.memory_space<smem>>, %arg5: memref<1x128xf32, #tpu.memory_space<vmem>>) attributes {dimension_semantics = [#tpu.dimension_semantics<parallel>], iteration_bounds = array<i64: 1>, scalar_prefetch = 2 : i64, scratch_operands = 0 : i64, tpu.core_type = #tpu.core_type<tc>, window_params = [{transform_indices = @transform_0, window_bounds = array<i64: 50>}, {transform_indices = @transform_1, window_bounds = array<i64: 1>}, {transform_indices = @transform_2, window_bounds = array<i64: 1, 128>}]} {
    %0 = tpu.iota {dimensions = array<i32: 1>} : vector<1x128xi32>
    %cst = arith.constant 0.000000e+00 : f32
    %1 = vector.broadcast %cst : f32 to vector<1x128xf32>
    %c0_i32 = arith.constant 0 : i32
    %c128_i32 = arith.constant 128 : i32
    %2 = arith.addi %c0_i32, %c128_i32 : i32
    %c1_i32 = arith.constant 1 : i32
    %3 = scf.for %arg6 = %c0_i32 to %2 step %c1_i32 iter_args(%arg7 = %1) -> (vector<1x128xf32>)  : i32 {
      %c128_i32_6 = arith.constant 128 : i32
      %15 = arith.muli %arg0, %c128_i32_6 : i32
      %16 = arith.addi %15, %arg6 : i32
      %17 = arith.index_cast %16 : i32 to index
      %18 = memref.load %arg2[%17] : memref<129xi32, #tpu.memory_space<smem>>
      %c1_i32_7 = arith.constant 1 : i32
      %19 = arith.addi %16, %c1_i32_7 : i32
      %20 = arith.index_cast %19 : i32 to index
      %21 = memref.load %arg2[%20] : memref<129xi32, #tpu.memory_space<smem>>
      %cst_8 = arith.constant 0.000000e+00 : f32
      %22 = arith.subi %21, %18 : i32
      %23 = arith.addi %18, %22 : i32
      %c1_i32_9 = arith.constant 1 : i32
      %24 = scf.for %arg8 = %18 to %23 step %c1_i32_9 iter_args(%arg9 = %cst_8) -> (f32)  : i32 {
        %29 = arith.index_cast %arg8 : i32 to index
        %30 = memref.load %arg1[%29] : memref<10xi32, #tpu.memory_space<smem>>
        %31 = arith.index_cast %30 : i32 to index
        %32 = memref.load %arg3[%31] : memref<50xf32, #tpu.memory_space<smem>>
        %33 = arith.addf %arg9, %32 : f32
        scf.yield %33 : f32
      }
      %25 = vector.broadcast %arg6 : i32 to vector<1x128xi32>
      %26 = arith.cmpi eq, %0, %25 : vector<1x128xi32>
      %27 = vector.broadcast %24 : f32 to vector<1x128xf32>
      %28 = arith.select %26, %27, %arg7 : vector<1x128xi1>, vector<1x128xf32>
      scf.yield %28 : vector<1x128xf32>
    }
    %c128_i32_0 = arith.constant 128 : i32
    %c0 = arith.constant 0 : index
    %4 = memref.load %arg4[%c0] : memref<1xf32, #tpu.memory_space<smem>>
    %5 = vector.broadcast %4 : f32 to vector<1x128xf32>
    %6 = arith.addf %3, %5 : vector<1x128xf32>
    %cst_1 = arith.constant 0.000000e+00 : f32
    %7 = vector.broadcast %cst_1 : f32 to vector<1x128xf32>
    %8 = arith.subf %7, %6 : vector<1x128xf32>
    %9 = math.exp %8 : vector<1x128xf32>
    %cst_2 = arith.constant 1.000000e+00 : f32
    %10 = vector.broadcast %cst_2 : f32 to vector<1x128xf32>
    %11 = arith.addf %10, %9 : vector<1x128xf32>
    %cst_3 = arith.constant 1.000000e+00 : f32
    %12 = vector.broadcast %cst_3 : f32 to vector<1x128xf32>
    %13 = arith.divf %12, %11 : vector<1x128xf32>
    %c0_4 = arith.constant 0 : index
    %c0_5 = arith.constant 0 : index
    %14 = vector.load %arg5[%c0_4, %c0_5] : memref<1x128xf32, #tpu.memory_space<vmem>>, vector<1x128xf32>
    tpu.vector_store %arg5[%c0_4, %c0_5], %13 {strides = array<i32>} : memref<1x128xf32, #tpu.memory_space<vmem>>, vector<1x128xf32>,
    return
  }
  func.func @transform_0(%arg0: i32, %arg1: memref<10xi32, #tpu.memory_space<smem>>, %arg2: memref<129xi32, #tpu.memory_space<smem>>) -> i32 {
    %c0_i32 = arith.constant 0 : i32
    %c0_i32_0 = arith.constant 0 : i32
    return %c0_i32 : i32
  }
  func.func @transform_1(%arg0: i32, %arg1: memref<10xi32, #tpu.memory_space<smem>>, %arg2: memref<129xi32, #tpu.memory_space<smem>>) -> i32 {
    %c0_i32 = arith.constant 0 : i32
    %c0_i32_0 = arith.constant 0 : i32
    return %c0_i32 : i32
  }
  func.func @transform_2(%arg0: i32, %arg1: memref<10xi32, #tpu.memory_space<smem>>, %arg2: memref<129xi32, #tpu.memory_space<smem>>) -> (i32, i32) {
    %c0_i32 = arith.constant 0 : i32
    %c0_i32_0 = arith.constant 0 : i32
    return %c0_i32, %arg0 : i32, i32
  }
}

</mosaic_0001>

<llo_original>
// kernel: tpu_custom_call.1
$region0: #{tpu_custom_call.1}
  #allocation0 [shape = 'u32[]', space=smem, size = 0x4, offset = 0x4, fixed_abs, tag = 'smem constant byte address 0x4 - core index']
  #allocation1 [shape = 'u32[144,128]{1,0:T(1,128)}', space=vmem, size = 0x12000, scoped, tag = 'internal scratch']
  #allocation2 [shape = 's32[1]{0}', space=sflag, size = 0x4, scoped, tag = 'scoped memory for tpu_custom_call.1']
  #allocation3 [shape = 'u8[512]{0}', space=smem, size = 0x200, scoped, tag = 'prefetched SMEM operand 0']
  #allocation4 [shape = 'u8[1024]{0}', space=smem, size = 0x400, scoped, tag = 'prefetched SMEM operand 1']
  #allocation5 [shape = 'f32[1]{0:T(128)S(6)}', space=smem, size = 0x200, scoped, tag = 'scoped memory for tpu_custom_call.1']
  %s0 = inlined_call_operand.vmem [shape: s32[10], index: 0, kind: input, shape index: {}]
  %s1 = inlined_call_operand.vmem [shape: s32[129], index: 1, kind: input, shape index: {}]
  %s2 = inlined_call_operand.vmem [shape: f32[50], index: 2, kind: input, shape index: {}]
  %s3 = inlined_call_operand.<no memory space> [shape: f32[1], index: 3, kind: input, shape index: {}]
  %s4 = inlined_call_operand.hbm [shape: f32[1,128], index: 4, kind: output, shape index: {}]
  %s5 = sld [smem:[#allocation0]]
  $region36: #{tpu_custom_call.1} parent=0
    _
  %s7 = ssub.s32 1, %s5
  %s8 = scalar_select 0, %s7, %s5
  %s9 = sshll.u32 %s0, 4
  %s10 = int_to_ptr.vmem [resolvable:$true] %s9
  %12 = dma.vmem_to_smem %s10, 16, [#allocation3], [#allocation2]
  %s13 = sshll.u32 %s1, 4
  %s14 = int_to_ptr.vmem [resolvable:$true] %s13
  %16 = dma.vmem_to_smem %s14, 32, [#allocation4], [#allocation2]
  %17 = sst [smem:[#allocation5]] %s3
  %18 = dma.done [#allocation2], 48
  %19 = sfence
  $region1: #{tpu_custom_call.1} parent=0
    #allocation6 [shape = 'u8[512]{0}', space=smem, size = 0x200, scoped, tag = 'input window, operand 2, single buffered']
    #allocation7 [shape = 's32[1]{0}', space=sflag, size = 0x4, scoped, tag = 'scoped memory for tpu_custom_call.1']
    #allocation8 [shape = 's32[1]{0}', space=sflag, size = 0x4, scoped, tag = 'scoped memory for tpu_custom_call.1']
    #allocation9 [shape = 'u8[512]{0}', space=vmem, size = 0x400, scoped, tag = 'output window, operand 0, single buffered']
    %20 = vsyncpa [#allocation8], 0
    %21 = vsyncpa [#allocation7], 0
    // Predicated region
    $region2: #{tpu_custom_call.1} parent=1 // pred_check
      _
    $region3: #{tpu_custom_call.1} parent=1 // pred_check_branch
      %23 = sbr.rel (0) target = $region5
    $region4: #{tpu_custom_call.1} parent=1 // pred_region
      %s25 = ssub.s32 16, 16
      %26 = vsyncadd [#allocation8], %s25
      %s28 = sshll.u32 %s2, 4
      %s29 = int_to_ptr.vmem [resolvable:$true] %s28
      %31 = dma.vmem_to_smem %s29, 16, [#allocation6], [#allocation8]
    $region5: #{tpu_custom_call.1} parent=1 // pred_fallthru
      _
    // Predicated region
    $region6: #{tpu_custom_call.1} parent=1 // pred_check
      _
    $region7: #{tpu_custom_call.1} parent=1 // pred_check_branch
      %33 = sbr.rel (0) target = $region9
    $region8: #{tpu_custom_call.1} parent=1 // pred_region
      _
    $region9: #{tpu_custom_call.1} parent=1 // pred_fallthru
      _
    // Predicated region
    $region10: #{tpu_custom_call.1} parent=1 // pred_check
      _
    $region11: #{tpu_custom_call.1} parent=1 // pred_check_branch
      %35 = sbr.rel (0) target = $region13
    $region12: #{tpu_custom_call.1} parent=1 // pred_region
      %36 = dma.done [#allocation8], 16
    $region13: #{tpu_custom_call.1} parent=1 // pred_fallthru
      _
    %37 = sfence
    %v38 = vlaneseq
    %v39 = vand.u32 %v38, 127
    loop: start=0, step=1, limit=128
    $region14: #{tpu_custom_call.1} parent=1 // loop_pre_header
      _
    $region15: #{tpu_custom_call.1} parent=1 // loop_header
      %s41 = sphi 0, %s45
      %p42 = scmp.ge.s32.totalorder %s41, 128
      %v46 = vphi 0.0, %v65
    $region16: #{tpu_custom_call.1} parent=1 // loop_header_branch
      %44 = sbr.rel (%p42) target = $region20
    $region17: #{tpu_custom_call.1} parent=1 // loop_body
      %s47 = smul.u32 0, 128
      %s48 = sadd.s32 %s47, %s41
      %s49 = sld [smem:[#allocation4 + %s48]]
      %s50 = sadd.s32 %s48, 1
      %s51 = sld [smem:[#allocation4 + %s50]]
      // While loop
      $region21: #{tpu_custom_call.1} parent=17 // loop_pre_header
        _
      $region22: #{tpu_custom_call.1} parent=17 // loop_header
        %s53 = sphi %s49, %s55
        %p54 = scmp.ge.s32.totalorder %s53, %s51
        %s58 = sphi 0.0, %s61
      $region23: #{tpu_custom_call.1} parent=17 // loop_header_branch
        %57 = sbr.rel (%p54) target = $region27
      $region24: #{tpu_custom_call.1} parent=17 // loop_body
        %s59 = sld [smem:[#allocation3 + %s53]]
        %s60 = sld [smem:[#allocation6 + %s59]]
        %s61 = sadd.f32 %s58, %s60
      $region25: #{tpu_custom_call.1} parent=17 // loop_footer
        %s55 = sadd.s32 %s53, 1
      $region26: #{tpu_custom_call.1} parent=17 // loop_footer_branch
        %52 = sbr.rel target = $region22
      $region27: #{tpu_custom_call.1} parent=17 // loop_exit
        _
      %v62 = vstv %s41
      %vm63 = vcmp.eq.s32.totalorder %v39, %v62
      %v64 = vstv %s58
      %v65 = vsel %vm63, %v64, %v46
    $region18: #{tpu_custom_call.1} parent=1 // loop_footer
      %s45 = sadd.s32 1, %s41
    $region19: #{tpu_custom_call.1} parent=1 // loop_footer_branch
      %40 = sbr.rel target = $region15
    $region20: #{tpu_custom_call.1} parent=1 // loop_exit
      _
    %s66 = sld [smem:[#allocation5]]
    %v67 = vstv %s66
    %v68 = vadd.f32 %v46, %v67
    %v69 = vsub.f32 0.0, %v68
    %v70 = vmul.f32 %v69, 1.442695
    %v71 = vpow.pop %v70
    %v72 = vadd.f32 %v71, 1.0
    %v73 = vrcp.pop %v72
    %v74 = vmul.f32 1.0, %v73
    %75 = vst [vmem:[#allocation9] sm:$0x1] %v74
    // Predicated region
    $region28: #{tpu_custom_call.1} parent=1 // pred_check
      _
    $region29: #{tpu_custom_call.1} parent=1 // pred_check_branch
      %77 = sbr.rel (0) target = $region31
    $region30: #{tpu_custom_call.1} parent=1 // pred_region
      %s79 = ssub.s32 16, 16
      %80 = vsyncadd [#allocation7], %s79
      %s82 = sshll.u32 [#allocation9], 4
      %s83 = int_to_ptr.vmem [resolvable:$true] %s82
      %85 = dma.vmem_to_hbm [thread:$0]  %s83, 16, %s4, [#allocation7]
    $region31: #{tpu_custom_call.1} parent=1 // pred_fallthru
      _
    // Predicated region
    $region32: #{tpu_custom_call.1} parent=1 // pred_check
      _
    $region33: #{tpu_custom_call.1} parent=1 // pred_check_branch
      %87 = sbr.rel (0) target = $region35
    $region34: #{tpu_custom_call.1} parent=1 // pred_region
      %88 = dma.done [#allocation7], 16
    $region35: #{tpu_custom_call.1} parent=1 // pred_fallthru
      _
    %89 = vsyncpa [#allocation7], 1
    %90 = vsyncpa [#allocation8], 1

</llo_original>
